<compile_context>
chip_gen: v5e
topology: v5e:2x2
jax: 0.10.0
libtpu: 0.0.40
codegen_flags: <defaults>
</compile_context>

<pallas_src>
import jax
import jax.numpy as jnp
from jax.experimental import pallas as pl
from jax.experimental.pallas import tpu as pltpu


def _round_up(n, m):
    return ((n + m - 1) // m) * m


def vade_cnn_kernel(x_ref, w1_ref, w2_ref, w3_ref, out_ref):
    # x_ref: (F_aug, TB) bf16 (row F is the constant-one "bias lane").
    # w*_ref: augmented bf16 weights with the biases folded in as columns.
    x = x_ref[...]

    # conv1 (1x1): bias folded into the contraction via the ones row of x.
    h1 = jnp.dot(w1_ref[...], x, preferred_element_type=jnp.float32)
    h1 = jnp.maximum(h1.astype(jnp.bfloat16), jnp.bfloat16(0))     # (C1A, TB)

    # conv2 (1x1): bias folded via the constant-one channel of h1.
    h2 = jnp.dot(w2_ref[...], h1, preferred_element_type=jnp.float32)
    h2 = jnp.maximum(h2.astype(jnp.bfloat16), jnp.bfloat16(0))     # (C2A, TB)

    # conv3 (1x1), no activation: bias folded via the constant-one channel of h2.
    y = jnp.dot(w3_ref[...], h2, preferred_element_type=jnp.float32)
    out_ref[...] = y.astype(out_ref.dtype)                          # (1, TB)


def vade_cnn_forward(x, w1, b1, w2, b2, w3, b3):
    """x: (B, F) f32; w1:(256,F), w2:(128,256), w3:(1,128); b*: (C,1).

    Returns (1, B) f32, matching PyTorch VADE_CNN.forward.
    """
    B, F = x.shape
    C1 = w1.shape[0]
    C2 = w2.shape[0]

    # Augmented dims: +1 for the bias/ones channel, padded to bf16 sublane (16).
    F_aug = _round_up(F + 1, 16)
    C1A = _round_up(C1 + 1, 16)
    C2A = _round_up(C2 + 1, 16)

    # Batch tile: multiple of 128, large enough to amortize per-step overhead.
    tb = min(4096, _round_up(B, 128))
    # Prefer >= 2 grid steps so v7x's two TensorCores both get a share of the
    # parallel batch axis (harmless on v5e/v6e).
    if _round_up(B, tb) // tb < 2 and tb >= 256:
        tb = _round_up((tb + 1) // 2, 128)
    B_pad = _round_up(B, tb)
    grid = (B_pad // tb,)

    # x_aug: (F_aug, B_pad) bf16; rows 0..F-1 = x.T, row F = 1 (bias lane).
    # TODO(synk): consider CompilerParams(allow_input_fusion=...) to fuse this
    # transpose/pad/cast into the pallas_call operand and skip one HBM pass.
    xt = jnp.zeros((F_aug, B_pad), jnp.bfloat16)
    xt = xt.at[:F, :B].set(x.T.astype(jnp.bfloat16))
    xt = xt.at[F, :].set(1.0)

    # w1_aug: (C1A, F_aug); column F holds b1; row C1 keeps the ones channel
    # alive in h1 (relu(1) == 1). Padding rows/cols are exactly zero.
    w1a = jnp.zeros((C1A, F_aug), jnp.bfloat16)
    w1a = w1a.at[:C1, :F].set(w1.astype(jnp.bfloat16))
    w1a = w1a.at[:C1, F].set(b1.reshape(C1).astype(jnp.bfloat16))
    w1a = w1a.at[C1, F].set(1.0)

    # w2_aug: (C2A, C1A); column C1 holds b2; row C2 keeps the ones channel.
    w2a = jnp.zeros((C2A, C1A), jnp.bfloat16)
    w2a = w2a.at[:C2, :C1].set(w2.astype(jnp.bfloat16))
    w2a = w2a.at[:C2, C1].set(b2.reshape(C2).astype(jnp.bfloat16))
    w2a = w2a.at[C2, C1].set(1.0)

    # w3_aug: (1, C2A); column C2 holds b3.
    w3a = jnp.zeros((1, C2A), jnp.bfloat16)
    w3a = w3a.at[:, :C2].set(w3.astype(jnp.bfloat16))
    w3a = w3a.at[0, C2].set(b3.reshape(()).astype(jnp.bfloat16))

    const2d = lambda shape: pl.BlockSpec(shape, lambda i: (0, 0))

    flops = 2 * B_pad * (C1A * F_aug + C2A * C1A + C2A)
    bytes_accessed = 2 * (xt.size + w1a.size + w2a.size + w3a.size) + 4 * B_pad

    out = pl.pallas_call(
        vade_cnn_kernel,
        out_shape=jax.ShapeDtypeStruct((1, B_pad), jnp.float32),
        grid=grid,
        in_specs=[
            pl.BlockSpec((F_aug, tb), lambda i: (0, i)),   # x tile (streamed)
            const2d((C1A, F_aug)),                         # w1+b1 (VMEM-resident)
            const2d((C2A, C1A)),                           # w2+b2
            const2d((1, C2A)),                             # w3+b3
        ],
        out_specs=pl.BlockSpec((1, tb), lambda i: (0, i)),
        compiler_params=pltpu.CompilerParams(
            dimension_semantics=("parallel",),
            vmem_limit_bytes=32 * 1024 * 1024),
        cost_estimate=pl.CostEstimate(
            flops=int(flops),
            transcendentals=0,
            bytes_accessed=int(bytes_accessed)),
    )(xt, w1a, w2a, w3a)

    # Padded batch columns compute relu(bias) garbage -- slice them off.
    return out[:, :B]


def init_params(key, feature_dim):
    """PyTorch Conv1d layout: weight (out_c, in_c) (kernel dim squeezed),
    bias stored as (out_c, 1)."""
    ks = jax.random.split(key, 6)

    def uniform(k, shape, fan_in):
        bound = 1.0 / jnp.sqrt(fan_in)
        return jax.random.uniform(k, shape, jnp.float32, -bound, bound)

    w1 = uniform(ks[0], (256, feature_dim), feature_dim)
    b1 = uniform(ks[1], (256, 1), feature_dim)
    w2 = uniform(ks[2], (128, 256), 256)
    b2 = uniform(ks[3], (128, 1), 256)
    w3 = uniform(ks[4], (1, 128), 128)
    b3 = uniform(ks[5], (1, 1), 128)
    return w1, b1, w2, b2, w3, b3


def reference_forward(x, w1, b1, w2, b2, w3, b3):
    """Pure-JAX reference using the same bf16-input / f32-accumulate casting
    points as the kernel (intentional, documented divergence from f32 PyTorch)."""
    f32 = jnp.float32
    bf = jnp.bfloat16
    xb = x.T.astype(bf)                                              # (F, B)
    h1 = jnp.maximum(
        jnp.dot(w1.astype(bf), xb, preferred_element_type=f32)
        + b1.astype(bf).astype(f32), 0.0)
    h2 = jnp.maximum(
        jnp.dot(w2.astype(bf), h1.astype(bf), preferred_element_type=f32)
        + b2.astype(bf).astype(f32), 0.0)
    y = (jnp.dot(w3.astype(bf), h2.astype(bf), preferred_element_type=f32)
         + b3.astype(bf).astype(f32))
    return y                                                         # (1, B)


if __name__ == "__main__":
    key = jax.random.PRNGKey(0)
    k_x, k_p = jax.random.split(key)

    batch = 8
    feature_dim = 32

    x = jax.random.normal(k_x, (batch, feature_dim), jnp.float32)
    params = init_params(k_p, feature_dim)

    out = jax.jit(vade_cnn_forward)(x, *params)
    out = jax.block_until_ready(out)

    ref = reference_forward(x, *params)
    assert out.shape == (1, batch), out.shape
    assert jnp.allclose(out, ref, atol=1e-3, rtol=1e-3), "mismatch vs reference"

    print("KERNEL_OK")
</pallas_src>

<mosaic_0001>
module attributes {stable_mosaic.version = 11 : i64} {
  func.func @vade_cnn_kernel(%arg0: i32, %arg1: memref<48x128xbf16, #tpu.memory_space<vmem>>, %arg2: memref<272x48xbf16, #tpu.memory_space<vmem>>, %arg3: memref<144x272xbf16, #tpu.memory_space<vmem>>, %arg4: memref<1x144xbf16, #tpu.memory_space<vmem>>, %arg5: memref<1x128xf32, #tpu.memory_space<vmem>>) attributes {dimension_semantics = [#tpu.dimension_semantics<parallel>], iteration_bounds = array<i64: 1>, scalar_prefetch = 0 : i64, scratch_operands = 0 : i64, tpu.core_type = #tpu.core_type<tc>, window_params = [{transform_indices = @transform_0, window_bounds = array<i64: 48, 128>}, {pipeline_mode = #tpu.pipeline_mode<synchronous>, transform_indices = @transform_1, window_bounds = array<i64: 272, 48>}, {pipeline_mode = #tpu.pipeline_mode<synchronous>, transform_indices = @transform_2, window_bounds = array<i64: 144, 272>}, {pipeline_mode = #tpu.pipeline_mode<synchronous>, transform_indices = @transform_3, window_bounds = array<i64: 1, 144>}, {transform_indices = @transform_4, window_bounds = array<i64: 1, 128>}]} {
    %c0 = arith.constant 0 : index
    %c0_0 = arith.constant 0 : index
    %0 = vector.load %arg1[%c0, %c0_0] : memref<48x128xbf16, #tpu.memory_space<vmem>>, vector<48x128xbf16>
    %c0_1 = arith.constant 0 : index
    %c0_2 = arith.constant 0 : index
    %1 = vector.load %arg2[%c0_1, %c0_2] : memref<272x48xbf16, #tpu.memory_space<vmem>>, vector<272x48xbf16>
    %cst = arith.constant dense<0.000000e+00> : vector<272x128xf32>
    %2 = tpu.matmul %1, %0, %cst {dimension_numbers = #tpu.dot_dimension_numbers<[1], [0], [0], [1], [0, 0, 1, 1], [], []>} : vector<272x48xbf16>, vector<48x128xbf16>, vector<272x128xf32> -> vector<272x128xf32>
    %3 = arith.truncf %2 : vector<272x128xf32> to vector<272x128xbf16>
    %cst_3 = arith.constant 0.000000e+00 : bf16
    %4 = vector.broadcast %cst_3 : bf16 to vector<272x128xbf16>
    %5 = arith.maximumf %3, %4 : vector<272x128xbf16>
    %c0_4 = arith.constant 0 : index
    %c0_5 = arith.constant 0 : index
    %6 = vector.load %arg3[%c0_4, %c0_5] : memref<144x272xbf16, #tpu.memory_space<vmem>>, vector<144x272xbf16>
    %cst_6 = arith.constant dense<0.000000e+00> : vector<144x128xf32>
    %7 = tpu.matmul %6, %5, %cst_6 {dimension_numbers = #tpu.dot_dimension_numbers<[1], [0], [0], [1], [0, 0, 1, 1], [], []>} : vector<144x272xbf16>, vector<272x128xbf16>, vector<144x128xf32> -> vector<144x128xf32>
    %8 = arith.truncf %7 : vector<144x128xf32> to vector<144x128xbf16>
    %cst_7 = arith.constant 0.000000e+00 : bf16
    %9 = vector.broadcast %cst_7 : bf16 to vector<144x128xbf16>
    %10 = arith.maximumf %8, %9 : vector<144x128xbf16>
    %c0_8 = arith.constant 0 : index
    %c0_9 = arith.constant 0 : index
    %11 = vector.load %arg4[%c0_8, %c0_9] : memref<1x144xbf16, #tpu.memory_space<vmem>>, vector<1x144xbf16>
    %cst_10 = arith.constant dense<0.000000e+00> : vector<1x128xf32>
    %12 = tpu.matmul %11, %10, %cst_10 {dimension_numbers = #tpu.dot_dimension_numbers<[1], [0], [0], [1], [0, 0, 1, 1], [], []>} : vector<1x144xbf16>, vector<144x128xbf16>, vector<1x128xf32> -> vector<1x128xf32>
    %c0_11 = arith.constant 0 : index
    %c0_12 = arith.constant 0 : index
    %13 = vector.load %arg5[%c0_11, %c0_12] : memref<1x128xf32, #tpu.memory_space<vmem>>, vector<1x128xf32>
    tpu.vector_store %arg5[%c0_11, %c0_12], %12 {strides = array<i32>} : memref<1x128xf32, #tpu.memory_space<vmem>>, vector<1x128xf32>,
    return
  }
  func.func @transform_0(%arg0: i32) -> (i32, i32) {
    %c0_i32 = arith.constant 0 : i32
    %c0_i32_0 = arith.constant 0 : i32
    return %c0_i32, %arg0 : i32, i32
  }
  func.func @transform_1(%arg0: i32) -> (i32, i32) {
    %c0_i32 = arith.constant 0 : i32
    %c0_i32_0 = arith.constant 0 : i32
    %c0_i32_1 = arith.constant 0 : i32
    return %c0_i32, %c0_i32_0 : i32, i32
  }
  func.func @transform_2(%arg0: i32) -> (i32, i32) {
    %c0_i32 = arith.constant 0 : i32
    %c0_i32_0 = arith.constant 0 : i32
    %c0_i32_1 = arith.constant 0 : i32
    return %c0_i32, %c0_i32_0 : i32, i32
  }
  func.func @transform_3(%arg0: i32) -> (i32, i32) {
    %c0_i32 = arith.constant 0 : i32
    %c0_i32_0 = arith.constant 0 : i32
    %c0_i32_1 = arith.constant 0 : i32
    return %c0_i32, %c0_i32_0 : i32, i32
  }
  func.func @transform_4(%arg0: i32) -> (i32, i32) {
    %c0_i32 = arith.constant 0 : i32
    %c0_i32_0 = arith.constant 0 : i32
    return %c0_i32, %arg0 : i32, i32
  }
}

</mosaic_0001>

<llo_original>
// kernel: vade_cnn_forward.1
$region0: #{vade_cnn_forward.1}
  #allocation0 [shape = 'u32[]', space=smem, size = 0x4, offset = 0x4, fixed_abs, tag = 'smem constant byte address 0x4 - core index']
  #allocation1 [shape = 'u32[72,128]{1,0:T(1,128)}', space=vmem, size = 0x9000, scoped, tag = 'internal scratch']
  %s0 = inlined_call_operand.vmem [shape: bf16[48,128], index: 0, kind: input, shape index: {}]
  %s1 = inlined_call_operand.vmem [shape: bf16[272,48], index: 1, kind: input, shape index: {}]
  %s2 = inlined_call_operand.vmem [shape: bf16[144,272], index: 2, kind: input, shape index: {}]
  %s3 = inlined_call_operand.vmem [shape: bf16[1,144], index: 3, kind: input, shape index: {}]
  %s4 = inlined_call_operand.hbm [shape: f32[1,128], index: 4, kind: output, shape index: {}]
  %s5 = sld [smem:[#allocation0]]
  $region26: #{vade_cnn_forward.1} parent=0
    _
  %s7 = ssub.s32 1, %s5
  %s8 = scalar_select 0, %s7, %s5
  $region1: #{vade_cnn_forward.1} parent=0
    #allocation2 [shape = 'u8[512]{0}', space=vmem, size = 0x400, scoped, tag = 'output window, operand 0, single buffered']
    #allocation3 [shape = 's32[1]{0}', space=sflag, size = 0x4, scoped, tag = 'scoped memory for vade_cnn_forward.1']
    %9 = vsyncpa [#allocation3], 0
    // Predicated region
    $region2: #{vade_cnn_forward.1} parent=1 // pred_check
      _
    $region3: #{vade_cnn_forward.1} parent=1 // pred_check_branch
      %11 = sbr.rel (0) target = $region5
    $region4: #{vade_cnn_forward.1} parent=1 // pred_region
      _
    $region5: #{vade_cnn_forward.1} parent=1 // pred_fallthru
      _
    // Predicated region
    $region6: #{vade_cnn_forward.1} parent=1 // pred_check
      _
    $region7: #{vade_cnn_forward.1} parent=1 // pred_check_branch
      %13 = sbr.rel (0) target = $region9
    $region8: #{vade_cnn_forward.1} parent=1 // pred_region
      _
    $region9: #{vade_cnn_forward.1} parent=1 // pred_fallthru
      _
    // Predicated region
    $region10: #{vade_cnn_forward.1} parent=1 // pred_check
      _
    $region11: #{vade_cnn_forward.1} parent=1 // pred_check_branch
      %15 = sbr.rel (0) target = $region13
    $region12: #{vade_cnn_forward.1} parent=1 // pred_region
      _
    $region13: #{vade_cnn_forward.1} parent=1 // pred_fallthru
      _
    // Predicated region
    $region14: #{vade_cnn_forward.1} parent=1 // pred_check
      _
    $region15: #{vade_cnn_forward.1} parent=1 // pred_check_branch
      %17 = sbr.rel (0) target = $region17
    $region16: #{vade_cnn_forward.1} parent=1 // pred_region
      _
    $region17: #{vade_cnn_forward.1} parent=1 // pred_fallthru
      _
    %v19 = vld [vmem:[%s0] sm:$0xf]
    %v20 = vld [vmem:[%s0 + $0x4] sm:$0xf]
    %v21 = vld [vmem:[%s0 + $0x8] sm:$0xf]
    %v22 = vld [vmem:[%s0 + $0xc] sm:$0xf]
    %v23 = vld [vmem:[%s0 + $0x10] sm:$0xf]
    %v24 = vld [vmem:[%s0 + $0x14] sm:$0xf]
    %v25 = vld [vmem:[%s1] sm:$0xf]
    %v26 = vld [vmem:[%s1 + $0x4] sm:$0xf]
    %v27 = vld [vmem:[%s1 + $0x8] sm:$0xf]
    %v28 = vld [vmem:[%s1 + $0xc] sm:$0xf]
    %v29 = vld [vmem:[%s1 + $0x10] sm:$0xf]
    %v30 = vld [vmem:[%s1 + $0x14] sm:$0xf]
    %v31 = vld [vmem:[%s1 + $0x18] sm:$0xf]
    %v32 = vld [vmem:[%s1 + $0x1c] sm:$0xf]
    %v33 = vld [vmem:[%s1 + $0x20] sm:$0xf]
    %v34 = vld [vmem:[%s1 + $0x24] sm:$0xf]
    %v35 = vld [vmem:[%s1 + $0x28] sm:$0xf]
    %v36 = vld [vmem:[%s1 + $0x2c] sm:$0xf]
    %v37 = vld [vmem:[%s1 + $0x30] sm:$0xf]
    %v38 = vld [vmem:[%s1 + $0x34] sm:$0xf]
    %v39 = vld [vmem:[%s1 + $0x38] sm:$0xf]
    %v40 = vld [vmem:[%s1 + $0x3c] sm:$0xf]
    %v41 = vld [vmem:[%s1 + $0x40] sm:$0xf]
    %v42 = vld [vmem:[%s1 + $0x44] sm:$0xf]
    %v43 = vld [vmem:[%s1 + $0x48] sm:$0xf]
    %v44 = vld [vmem:[%s1 + $0x4c] sm:$0xf]
    %v45 = vld [vmem:[%s1 + $0x50] sm:$0xf]
    %v46 = vld [vmem:[%s1 + $0x54] sm:$0xf]
    %v47 = vld [vmem:[%s1 + $0x58] sm:$0xf]
    %v48 = vld [vmem:[%s1 + $0x5c] sm:$0xf]
    %v49 = vld [vmem:[%s1 + $0x60] sm:$0xf]
    %v50 = vld [vmem:[%s1 + $0x64] sm:$0xf]
    %v51 = vld [vmem:[%s1 + $0x68] sm:$0xf]
    %v52 = vld [vmem:[%s1 + $0x6c] sm:$0xf]
    %v53 = vld [vmem:[%s1 + $0x70] sm:$0xf]
    %v54 = vld [vmem:[%s1 + $0x74] sm:$0xf]
    %v55 = vld [vmem:[%s1 + $0x78] sm:$0xf]
    %v56 = vld [vmem:[%s1 + $0x7c] sm:$0xf]
    %v57 = vld [vmem:[%s1 + $0x80] sm:$0xf]
    %v58 = vld [vmem:[%s1 + $0x84] sm:$0xf]
    %v93 = vunpack.c.l.b16 %v25
    %v94 = vunpack.c.l.b16 %v26
    %v95 = vunpack.c.l.b16 %v27
    %v96 = vunpack.c.l.b16 %v28
    %v97 = vunpack.c.l.b16 %v29
    %v98 = vunpack.c.l.b16 %v30
    %v99 = vunpack.c.l.b16 %v31
    %v100 = vunpack.c.l.b16 %v32
    %v101 = vunpack.c.l.b16 %v33
    %v102 = vunpack.c.l.b16 %v34
    %v103 = vunpack.c.l.b16 %v35
    %v104 = vunpack.c.l.b16 %v36
    %v105 = vunpack.c.l.b16 %v37
    %v106 = vunpack.c.l.b16 %v38
    %v107 = vunpack.c.l.b16 %v39
    %v108 = vunpack.c.l.b16 %v40
    %v109 = vunpack.c.l.b16 %v41
    %v110 = vunpack.c.l.b16 %v42
    %v111 = vunpack.c.l.b16 %v43
    %v112 = vunpack.c.l.b16 %v44
    %v113 = vunpack.c.l.b16 %v45
    %v114 = vunpack.c.l.b16 %v46
    %v115 = vunpack.c.l.b16 %v47
    %v116 = vunpack.c.l.b16 %v48
    %v117 = vunpack.c.l.b16 %v49
    %v118 = vunpack.c.l.b16 %v50
    %v119 = vunpack.c.l.b16 %v51
    %v120 = vunpack.c.l.b16 %v52
    %v121 = vunpack.c.l.b16 %v53
    %v122 = vunpack.c.l.b16 %v54
    %v123 = vunpack.c.l.b16 %v55
    %v124 = vunpack.c.l.b16 %v56
    %v125 = vunpack.c.l.b16 %v57
    %v126 = vunpack.c.l.b16 %v58
    %v127 = vpack.c.b16 %v94, %v93
    %v128 = vpack.c.b16 %v96, %v95
    %v129 = vpack.c.b16 %v98, %v97
    %v130 = vpack.c.b16 %v100, %v99
    %v131 = vpack.c.b16 %v102, %v101
    %v132 = vpack.c.b16 %v104, %v103
    %v133 = vpack.c.b16 %v106, %v105
    %v134 = vpack.c.b16 %v108, %v107
    %v135 = vpack.c.b16 %v110, %v109
    %v136 = vpack.c.b16 %v112, %v111
    %v137 = vpack.c.b16 %v114, %v113
    %v138 = vpack.c.b16 %v116, %v115
    %v139 = vpack.c.b16 %v118, %v117
    %v140 = vpack.c.b16 %v120, %v119
    %v141 = vpack.c.b16 %v122, %v121
    %v142 = vpack.c.b16 %v124, %v123
    %v143 = vpack.c.b16 %v126, %v125
    %v150 = vunpack.c.l.b16 %v19
    %v151 = vunpack.c.l.b16 %v20
    %v152 = vunpack.c.l.b16 %v21
    %v153 = vunpack.c.l.b16 %v22
    %v154 = vunpack.c.l.b16 %v23
    %v155 = vunpack.c.l.b16 %v24
    %v156 = vpack.c.b16 %v151, %v150
    %v157 = vpack.c.b16 %v153, %v152
    %v158 = vpack.c.b16 %v155, %v154
    %vm162 = vcmask 392192
    %v164 = vsel %vm162, %v127, 0
    %v167 = vsel %vm162, %v128, 0
    %v170 = vsel %vm162, %v129, 0
    %v173 = vsel %vm162, %v130, 0
    %v176 = vsel %vm162, %v131, 0
    %v179 = vsel %vm162, %v132, 0
    %v182 = vsel %vm162, %v133, 0
    %v185 = vsel %vm162, %v134, 0
    %v188 = vsel %vm162, %v135, 0
    %v191 = vsel %vm162, %v136, 0
    %v194 = vsel %vm162, %v137, 0
    %v197 = vsel %vm162, %v138, 0
    %v200 = vsel %vm162, %v139, 0
    %v203 = vsel %vm162, %v140, 0
    %v206 = vsel %vm162, %v141, 0
    %v209 = vsel %vm162, %v142, 0
    %v212 = vsel %vm162, %v143, 0
    %214 = vmatpush.bf16.msra.mxu0 0
    %215 = vmatpush.bf16.msra.mxu0 0
    %216 = vmatpush.bf16.msra.mxu0 0
    %217 = vmatpush.bf16.msra.mxu0 0
    %218 = vmatpush.bf16.msra.mxu0 0
    %219 = vmatpush.bf16.msra.mxu0 %v158
    %220 = vmatpush.bf16.msra.mxu0 %v157
    %221 = vmatpush.bf16.msra.mxu0 %v156
    %222 = vmatmul.bf16.gmra.mxu0 %v164
    %v223 = vpop.f32.mrf.mxu0
    %v224 = vadd.f32 0.0, %v223
    %v225 = vpop.f32.mrf.mxu0
    %v226 = vadd.f32 0.0, %v225
    %227 = vmatmul.bf16.gmra.mxu0 %v167
    %v228 = vpop.f32.mrf.mxu0
    %v229 = vadd.f32 0.0, %v228
    %v230 = vpop.f32.mrf.mxu0
    %v231 = vadd.f32 0.0, %v230
    %232 = vmatmul.bf16.gmra.mxu0 %v170
    %v233 = vpop.f32.mrf.mxu0
    %v234 = vadd.f32 0.0, %v233
    %v235 = vpop.f32.mrf.mxu0
    %v236 = vadd.f32 0.0, %v235
    %237 = vmatmul.bf16.gmra.mxu0 %v173
    %v238 = vpop.f32.mrf.mxu0
    %v239 = vadd.f32 0.0, %v238
    %v240 = vpop.f32.mrf.mxu0
    %v241 = vadd.f32 0.0, %v240
    %242 = vmatmul.bf16.gmra.mxu0 %v176
    %v243 = vpop.f32.mrf.mxu0
    %v244 = vadd.f32 0.0, %v243
    %v245 = vpop.f32.mrf.mxu0
    %v246 = vadd.f32 0.0, %v245
    %247 = vmatmul.bf16.gmra.mxu0 %v179
    %v248 = vpop.f32.mrf.mxu0
    %v249 = vadd.f32 0.0, %v248
    %v250 = vpop.f32.mrf.mxu0
    %v251 = vadd.f32 0.0, %v250
    %252 = vmatmul.bf16.gmra.mxu0 %v182
    %v253 = vpop.f32.mrf.mxu0
    %v254 = vadd.f32 0.0, %v253
    %v255 = vpop.f32.mrf.mxu0
    %v256 = vadd.f32 0.0, %v255
    %257 = vmatmul.bf16.gmra.mxu0 %v185
    %v258 = vpop.f32.mrf.mxu0
    %v259 = vadd.f32 0.0, %v258
    %v260 = vpop.f32.mrf.mxu0
    %v261 = vadd.f32 0.0, %v260
    %262 = vmatmul.bf16.gmra.mxu0 %v188
    %v263 = vpop.f32.mrf.mxu0
    %v264 = vadd.f32 0.0, %v263
    %v265 = vpop.f32.mrf.mxu0
    %v266 = vadd.f32 0.0, %v265
    %267 = vmatmul.bf16.gmra.mxu0 %v191
    %v268 = vpop.f32.mrf.mxu0
    %v269 = vadd.f32 0.0, %v268
    %v270 = vpop.f32.mrf.mxu0
    %v271 = vadd.f32 0.0, %v270
    %272 = vmatmul.bf16.gmra.mxu0 %v194
    %v273 = vpop.f32.mrf.mxu0
    %v274 = vadd.f32 0.0, %v273
    %v275 = vpop.f32.mrf.mxu0
    %v276 = vadd.f32 0.0, %v275
    %277 = vmatmul.bf16.gmra.mxu0 %v197
    %v278 = vpop.f32.mrf.mxu0
    %v279 = vadd.f32 0.0, %v278
    %v280 = vpop.f32.mrf.mxu0
    %v281 = vadd.f32 0.0, %v280
    %282 = vmatmul.bf16.gmra.mxu0 %v200
    %v283 = vpop.f32.mrf.mxu0
    %v284 = vadd.f32 0.0, %v283
    %v285 = vpop.f32.mrf.mxu0
    %v286 = vadd.f32 0.0, %v285
    %287 = vmatmul.bf16.gmra.mxu0 %v203
    %v288 = vpop.f32.mrf.mxu0
    %v289 = vadd.f32 0.0, %v288
    %v290 = vpop.f32.mrf.mxu0
    %v291 = vadd.f32 0.0, %v290
    %292 = vmatmul.bf16.gmra.mxu0 %v206
    %v293 = vpop.f32.mrf.mxu0
    %v294 = vadd.f32 0.0, %v293
    %v295 = vpop.f32.mrf.mxu0
    %v296 = vadd.f32 0.0, %v295
    %297 = vmatmul.bf16.gmra.mxu0 %v209
    %v298 = vpop.f32.mrf.mxu0
    %v299 = vadd.f32 0.0, %v298
    %v300 = vpop.f32.mrf.mxu0
    %v301 = vadd.f32 0.0, %v300
    %302 = vmatmul.bf16.gmra.mxu0 %v212
    %v303 = vpop.f32.mrf.mxu0
    %v304 = vadd.f32 0.0, %v303
    %v305 = vpop.f32.mrf.mxu0
    %v306 = vadd.f32 0.0, %v305
    %307 = vdwg.mxu0
    %v308 = vpack.c.bf16 %v224, %v224
    %v309 = vpack.c.bf16 %v226, %v226
    %v310 = vpack.c.bf16 %v229, %v229
    %v311 = vpack.c.bf16 %v231, %v231
    %v312 = vpack.c.bf16 %v234, %v234
    %v313 = vpack.c.bf16 %v236, %v236
    %v314 = vpack.c.bf16 %v239, %v239
    %v315 = vpack.c.bf16 %v241, %v241
    %v316 = vpack.c.bf16 %v244, %v244
    %v317 = vpack.c.bf16 %v246, %v246
    %v318 = vpack.c.bf16 %v249, %v249
    %v319 = vpack.c.bf16 %v251, %v251
    %v320 = vpack.c.bf16 %v254, %v254
    %v321 = vpack.c.bf16 %v256, %v256
    %v322 = vpack.c.bf16 %v259, %v259
    %v323 = vpack.c.bf16 %v261, %v261
    %v324 = vpack.c.bf16 %v264, %v264
    %v325 = vpack.c.bf16 %v266, %v266
    %v326 = vpack.c.bf16 %v269, %v269
    %v327 = vpack.c.bf16 %v271, %v271
    %v328 = vpack.c.bf16 %v274, %v274
    %v329 = vpack.c.bf16 %v276, %v276
    %v330 = vpack.c.bf16 %v279, %v279
    %v331 = vpack.c.bf16 %v281, %v281
    %v332 = vpack.c.bf16 %v284, %v284
    %v333 = vpack.c.bf16 %v286, %v286
    %v334 = vpack.c.bf16 %v289, %v289
    %v335 = vpack.c.bf16 %v291, %v291
    %v336 = vpack.c.bf16 %v294, %v294
    %v337 = vpack.c.bf16 %v296, %v296
    %v338 = vpack.c.bf16 %v299, %v299
    %v339 = vpack.c.bf16 %v301, %v301
    %v340 = vpack.c.bf16 %v304, %v304
    %v341 = vpack.c.bf16 %v306, %v306
    %v342 = vunpack.c.l.bf16 %v308
    %v343 = vunpack.c.l.bf16 %v309
    %v344 = vunpack.c.l.bf16 %v310
    %v345 = vunpack.c.l.bf16 %v311
    %v346 = vunpack.c.l.bf16 %v312
    %v347 = vunpack.c.l.bf16 %v313
    %v348 = vunpack.c.l.bf16 %v314
    %v349 = vunpack.c.l.bf16 %v315
    %v350 = vunpack.c.l.bf16 %v316
    %v351 = vunpack.c.l.bf16 %v317
    %v352 = vunpack.c.l.bf16 %v318
    %v353 = vunpack.c.l.bf16 %v319
    %v354 = vunpack.c.l.bf16 %v320
    %v355 = vunpack.c.l.bf16 %v321
    %v356 = vunpack.c.l.bf16 %v322
    %v357 = vunpack.c.l.bf16 %v323
    %v358 = vunpack.c.l.bf16 %v324
    %v359 = vunpack.c.l.bf16 %v325
    %v360 = vunpack.c.l.bf16 %v326
    %v361 = vunpack.c.l.bf16 %v327
    %v362 = vunpack.c.l.bf16 %v328
    %v363 = vunpack.c.l.bf16 %v329
    %v364 = vunpack.c.l.bf16 %v330
    %v365 = vunpack.c.l.bf16 %v331
    %v366 = vunpack.c.l.bf16 %v332
    %v367 = vunpack.c.l.bf16 %v333
    %v368 = vunpack.c.l.bf16 %v334
    %v369 = vunpack.c.l.bf16 %v335
    %v370 = vunpack.c.l.bf16 %v336
    %v371 = vunpack.c.l.bf16 %v337
    %v372 = vunpack.c.l.bf16 %v338
    %v373 = vunpack.c.l.bf16 %v339
    %v374 = vunpack.c.l.bf16 %v340
    %v375 = vunpack.c.l.bf16 %v341
    %v376 = vmax.f32 %v342, 0.0
    %v377 = vmax.f32 %v343, 0.0
    %v378 = vmax.f32 %v344, 0.0
    %v379 = vmax.f32 %v345, 0.0
    %v380 = vmax.f32 %v346, 0.0
    %v381 = vmax.f32 %v347, 0.0
    %v382 = vmax.f32 %v348, 0.0
    %v383 = vmax.f32 %v349, 0.0
    %v384 = vmax.f32 %v350, 0.0
    %v385 = vmax.f32 %v351, 0.0
    %v386 = vmax.f32 %v352, 0.0
    %v387 = vmax.f32 %v353, 0.0
    %v388 = vmax.f32 %v354, 0.0
    %v389 = vmax.f32 %v355, 0.0
    %v390 = vmax.f32 %v356, 0.0
    %v391 = vmax.f32 %v357, 0.0
    %v392 = vmax.f32 %v358, 0.0
    %v393 = vmax.f32 %v359, 0.0
    %v394 = vmax.f32 %v360, 0.0
    %v395 = vmax.f32 %v361, 0.0
    %v396 = vmax.f32 %v362, 0.0
    %v397 = vmax.f32 %v363, 0.0
    %v398 = vmax.f32 %v364, 0.0
    %v399 = vmax.f32 %v365, 0.0
    %v400 = vmax.f32 %v366, 0.0
    %v401 = vmax.f32 %v367, 0.0
    %v402 = vmax.f32 %v368, 0.0
    %v403 = vmax.f32 %v369, 0.0
    %v404 = vmax.f32 %v370, 0.0
    %v405 = vmax.f32 %v371, 0.0
    %v406 = vmax.f32 %v372, 0.0
    %v407 = vmax.f32 %v373, 0.0
    %v408 = vmax.f32 %v374, 0.0
    %v409 = vmax.f32 %v375, 0.0
    %v410 = vpack.c.bf16 %v377, %v376
    %v411 = vpack.c.bf16 %v379, %v378
    %v412 = vpack.c.bf16 %v381, %v380
    %v413 = vpack.c.bf16 %v383, %v382
    %v414 = vpack.c.bf16 %v385, %v384
    %v415 = vpack.c.bf16 %v387, %v386
    %v416 = vpack.c.bf16 %v389, %v388
    %v417 = vpack.c.bf16 %v391, %v390
    %v418 = vpack.c.bf16 %v393, %v392
    %v419 = vpack.c.bf16 %v395, %v394
    %v420 = vpack.c.bf16 %v397, %v396
    %v421 = vpack.c.bf16 %v399, %v398
    %v422 = vpack.c.bf16 %v401, %v400
    %v423 = vpack.c.bf16 %v403, %v402
    %v424 = vpack.c.bf16 %v405, %v404
    %v425 = vpack.c.bf16 %v407, %v406
    %v426 = vpack.c.bf16 %v409, %v408
    %v427 = vld [vmem:[%s2] sm:$0xff]
    %v428 = vld [vmem:[%s2 + $0x8] sm:$0xf]
    %v429 = vld [vmem:[%s2 + $0xc] sm:$0xff]
    %v430 = vld [vmem:[%s2 + $0x14] sm:$0xf]
    %v431 = vld [vmem:[%s2 + $0x18] sm:$0xff]
    %v432 = vld [vmem:[%s2 + $0x20] sm:$0xf]
    %v433 = vld [vmem:[%s2 + $0x24] sm:$0xff]
    %v434 = vld [vmem:[%s2 + $0x2c] sm:$0xf]
    %v435 = vld [vmem:[%s2 + $0x30] sm:$0xff]
    %v436 = vld [vmem:[%s2 + $0x38] sm:$0xf]
    %v437 = vld [vmem:[%s2 + $0x3c] sm:$0xff]
    %v438 = vld [vmem:[%s2 + $0x44] sm:$0xf]
    %v439 = vld [vmem:[%s2 + $0x48] sm:$0xff]
    %v440 = vld [vmem:[%s2 + $0x50] sm:$0xf]
    %v441 = vld [vmem:[%s2 + $0x54] sm:$0xff]
    %v442 = vld [vmem:[%s2 + $0x5c] sm:$0xf]
    %v443 = vld [vmem:[%s2 + $0x60] sm:$0xff]
    %v444 = vld [vmem:[%s2 + $0x68] sm:$0xf]
    %v445 = vld [vmem:[%s2 + $0x6c] sm:$0xff]
    %v446 = vld [vmem:[%s2 + $0x74] sm:$0xf]
    %v447 = vld [vmem:[%s2 + $0x78] sm:$0xff]
    %v448 = vld [vmem:[%s2 + $0x80] sm:$0xf]
    %v449 = vld [vmem:[%s2 + $0x84] sm:$0xff]
    %v450 = vld [vmem:[%s2 + $0x8c] sm:$0xf]
    %v451 = vld [vmem:[%s2 + $0x90] sm:$0xff]
    %v452 = vld [vmem:[%s2 + $0x98] sm:$0xf]
    %v453 = vld [vmem:[%s2 + $0x9c] sm:$0xff]
    %v454 = vld [vmem:[%s2 + $0xa4] sm:$0xf]
    %v455 = vld [vmem:[%s2 + $0xa8] sm:$0xff]
    %v456 = vld [vmem:[%s2 + $0xb0] sm:$0xf]
    %v457 = vld [vmem:[%s2 + $0xb4] sm:$0xff]
    %v458 = vld [vmem:[%s2 + $0xbc] sm:$0xf]
    %v459 = vld [vmem:[%s2 + $0xc0] sm:$0xff]
    %v460 = vld [vmem:[%s2 + $0xc8] sm:$0xf]
    %v461 = vld [vmem:[%s2 + $0xcc] sm:$0xff]
    %v462 = vld [vmem:[%s2 + $0xd4] sm:$0xf]
    %v499 = vunpack.c.l.b16 %v427
    %v500 = vunpack.c.h.b16 %v427
    %v501 = vunpack.c.l.b16 %v428
    %v502 = vunpack.c.l.b16 %v429
    %v503 = vunpack.c.h.b16 %v429
    %v504 = vunpack.c.l.b16 %v430
    %v505 = vunpack.c.l.b16 %v431
    %v506 = vunpack.c.h.b16 %v431
    %v507 = vunpack.c.l.b16 %v432
    %v508 = vunpack.c.l.b16 %v433
    %v509 = vunpack.c.h.b16 %v433
    %v510 = vunpack.c.l.b16 %v434
    %v511 = vunpack.c.l.b16 %v435
    %v512 = vunpack.c.h.b16 %v435
    %v513 = vunpack.c.l.b16 %v436
    %v514 = vunpack.c.l.b16 %v437
    %v515 = vunpack.c.h.b16 %v437
    %v516 = vunpack.c.l.b16 %v438
    %v517 = vunpack.c.l.b16 %v439
    %v518 = vunpack.c.h.b16 %v439
    %v519 = vunpack.c.l.b16 %v440
    %v520 = vunpack.c.l.b16 %v441
    %v521 = vunpack.c.h.b16 %v441
    %v522 = vunpack.c.l.b16 %v442
    %v523 = vunpack.c.l.b16 %v443
    %v524 = vunpack.c.h.b16 %v443
    %v525 = vunpack.c.l.b16 %v444
    %v526 = vunpack.c.l.b16 %v445
    %v527 = vunpack.c.h.b16 %v445
    %v528 = vunpack.c.l.b16 %v446
    %v529 = vunpack.c.l.b16 %v447
    %v530 = vunpack.c.h.b16 %v447
    %v531 = vunpack.c.l.b16 %v448
    %v532 = vunpack.c.l.b16 %v449
    %v533 = vunpack.c.h.b16 %v449
    %v534 = vunpack.c.l.b16 %v450
    %v535 = vunpack.c.l.b16 %v451
    %v536 = vunpack.c.h.b16 %v451
    %v537 = vunpack.c.l.b16 %v452
    %v538 = vunpack.c.l.b16 %v453
    %v539 = vunpack.c.h.b16 %v453
    %v540 = vunpack.c.l.b16 %v454
    %v541 = vunpack.c.l.b16 %v455
    %v542 = vunpack.c.h.b16 %v455
    %v543 = vunpack.c.l.b16 %v456
    %v544 = vunpack.c.l.b16 %v457
    %v545 = vunpack.c.h.b16 %v457
    %v546 = vunpack.c.l.b16 %v458
    %v547 = vunpack.c.l.b16 %v459
    %v548 = vunpack.c.h.b16 %v459
    %v549 = vunpack.c.l.b16 %v460
    %v550 = vunpack.c.l.b16 %v461
    %v551 = vunpack.c.h.b16 %v461
    %v552 = vunpack.c.l.b16 %v462
    %v553 = vpack.c.b16 %v502, %v499
    %v554 = vpack.c.b16 %v503, %v500
    %v555 = vpack.c.b16 %v504, %v501
    %v556 = vpack.c.b16 %v508, %v505
    %v557 = vpack.c.b16 %v509, %v506
    %v558 = vpack.c.b16 %v510, %v507
    %v559 = vpack.c.b16 %v514, %v511
    %v560 = vpack.c.b16 %v515, %v512
    %v561 = vpack.c.b16 %v516, %v513
    %v562 = vpack.c.b16 %v520, %v517
    %v563 = vpack.c.b16 %v521, %v518
    %v564 = vpack.c.b16 %v522, %v519
    %v565 = vpack.c.b16 %v526, %v523
    %v566 = vpack.c.b16 %v527, %v524
    %v567 = vpack.c.b16 %v528, %v525
    %v568 = vpack.c.b16 %v532, %v529
    %v569 = vpack.c.b16 %v533, %v530
    %v570 = vpack.c.b16 %v534, %v531
    %v571 = vpack.c.b16 %v538, %v535
    %v572 = vpack.c.b16 %v539, %v536
    %v573 = vpack.c.b16 %v540, %v537
    %v574 = vpack.c.b16 %v544, %v541
    %v575 = vpack.c.b16 %v545, %v542
    %v576 = vpack.c.b16 %v546, %v543
    %v577 = vpack.c.b16 %v550, %v547
    %v578 = vpack.c.b16 %v551, %v548
    %v579 = vpack.c.b16 %v552, %v549
    %vm598 = vcmask 130048
    %v600 = vsel %vm598, %v555, 0
    %v603 = vsel %vm598, %v558, 0
    %v606 = vsel %vm598, %v561, 0
    %v609 = vsel %vm598, %v564, 0
    %v612 = vsel %vm598, %v567, 0
    %v615 = vsel %vm598, %v570, 0
    %v618 = vsel %vm598, %v573, 0
    %v621 = vsel %vm598, %v576, 0
    %v624 = vsel %vm598, %v579, 0
    %626 = vmatpush.bf16.msra.mxu0 %v417
    %627 = vmatpush.bf16.msra.mxu0 %v416
    %628 = vmatpush.bf16.msra.mxu0 %v415
    %629 = vmatpush.bf16.msra.mxu0 %v414
    %630 = vmatpush.bf16.msra.mxu0 %v413
    %631 = vmatpush.bf16.msra.mxu0 %v412
    %632 = vmatpush.bf16.msra.mxu0 %v411
    %633 = vmatpush.bf16.msra.mxu0 %v410
    %634 = vmatmul.bf16.gmra.mxu0 %v553
    %v635 = vpop.f32.mrf.mxu0
    %v636 = vadd.f32 0.0, %v635
    %v637 = vpop.f32.mrf.mxu0
    %v638 = vadd.f32 0.0, %v637
    %639 = vmatmul.bf16.gmra.mxu0 %v556
    %v640 = vpop.f32.mrf.mxu0
    %v641 = vadd.f32 0.0, %v640
    %v642 = vpop.f32.mrf.mxu0
    %v643 = vadd.f32 0.0, %v642
    %644 = vmatmul.bf16.gmra.mxu0 %v559
    %v645 = vpop.f32.mrf.mxu0
    %v646 = vadd.f32 0.0, %v645
    %v647 = vpop.f32.mrf.mxu0
    %v648 = vadd.f32 0.0, %v647
    %649 = vmatmul.bf16.gmra.mxu0 %v562
    %v650 = vpop.f32.mrf.mxu0
    %v651 = vadd.f32 0.0, %v650
    %v652 = vpop.f32.mrf.mxu0
    %v653 = vadd.f32 0.0, %v652
    %654 = vmatmul.bf16.gmra.mxu0 %v565
    %v655 = vpop.f32.mrf.mxu0
    %v656 = vadd.f32 0.0, %v655
    %v657 = vpop.f32.mrf.mxu0
    %v658 = vadd.f32 0.0, %v657
    %659 = vmatmul.bf16.gmra.mxu0 %v568
    %v660 = vpop.f32.mrf.mxu0
    %v661 = vadd.f32 0.0, %v660
    %v662 = vpop.f32.mrf.mxu0
    %v663 = vadd.f32 0.0, %v662
    %664 = vmatmul.bf16.gmra.mxu0 %v571
    %v665 = vpop.f32.mrf.mxu0
    %v666 = vadd.f32 0.0, %v665
    %v667 = vpop.f32.mrf.mxu0
    %v668 = vadd.f32 0.0, %v667
    %669 = vmatmul.bf16.gmra.mxu0 %v574
    %v670 = vpop.f32.mrf.mxu0
    %v671 = vadd.f32 0.0, %v670
    %v672 = vpop.f32.mrf.mxu0
    %v673 = vadd.f32 0.0, %v672
    %674 = vmatmul.bf16.gmra.mxu0 %v577
    %v675 = vpop.f32.mrf.mxu0
    %v676 = vadd.f32 0.0, %v675
    %v677 = vpop.f32.mrf.mxu0
    %v678 = vadd.f32 0.0, %v677
    %679 = vdwg.mxu0
    %680 = vmatpush.bf16.msra.mxu0 %v425
    %681 = vmatpush.bf16.msra.mxu0 %v424
    %682 = vmatpush.bf16.msra.mxu0 %v423
    %683 = vmatpush.bf16.msra.mxu0 %v422
    %684 = vmatpush.bf16.msra.mxu0 %v421
    %685 = vmatpush.bf16.msra.mxu0 %v420
    %686 = vmatpush.bf16.msra.mxu0 %v419
    %687 = vmatpush.bf16.msra.mxu0 %v418
    %688 = vmatmul.bf16.gmra.mxu0 %v554
    %v689 = vpop.f32.mrf.mxu0
    %v690 = vadd.f32 %v636, %v689
    %v691 = vpop.f32.mrf.mxu0
    %v692 = vadd.f32 %v638, %v691
    %693 = vmatmul.bf16.gmra.mxu0 %v557
    %v694 = vpop.f32.mrf.mxu0
    %v695 = vadd.f32 %v641, %v694
    %v696 = vpop.f32.mrf.mxu0
    %v697 = vadd.f32 %v643, %v696
    %698 = vmatmul.bf16.gmra.mxu0 %v560
    %v699 = vpop.f32.mrf.mxu0
    %v700 = vadd.f32 %v646, %v699
    %v701 = vpop.f32.mrf.mxu0
    %v702 = vadd.f32 %v648, %v701
    %703 = vmatmul.bf16.gmra.mxu0 %v563
    %v704 = vpop.f32.mrf.mxu0
    %v705 = vadd.f32 %v651, %v704
    %v706 = vpop.f32.mrf.mxu0
    %v707 = vadd.f32 %v653, %v706
    %708 = vmatmul.bf16.gmra.mxu0 %v566
    %v709 = vpop.f32.mrf.mxu0
    %v710 = vadd.f32 %v656, %v709
    %v711 = vpop.f32.mrf.mxu0
    %v712 = vadd.f32 %v658, %v711
    %713 = vmatmul.bf16.gmra.mxu0 %v569
    %v714 = vpop.f32.mrf.mxu0
    %v715 = vadd.f32 %v661, %v714
    %v716 = vpop.f32.mrf.mxu0
    %v717 = vadd.f32 %v663, %v716
    %718 = vmatmul.bf16.gmra.mxu0 %v572
    %v719 = vpop.f32.mrf.mxu0
    %v720 = vadd.f32 %v666, %v719
    %v721 = vpop.f32.mrf.mxu0
    %v722 = vadd.f32 %v668, %v721
    %723 = vmatmul.bf16.gmra.mxu0 %v575
    %v724 = vpop.f32.mrf.mxu0
    %v725 = vadd.f32 %v671, %v724
    %v726 = vpop.f32.mrf.mxu0
    %v727 = vadd.f32 %v673, %v726
    %728 = vmatmul.bf16.gmra.mxu0 %v578
    %v729 = vpop.f32.mrf.mxu0
    %v730 = vadd.f32 %v676, %v729
    %v731 = vpop.f32.mrf.mxu0
    %v732 = vadd.f32 %v678, %v731
    %733 = vdwg.mxu0
    %734 = vmatpush.bf16.msra.mxu0 0
    %735 = vmatpush.bf16.msra.mxu0 0
    %736 = vmatpush.bf16.msra.mxu0 0
    %737 = vmatpush.bf16.msra.mxu0 0
    %738 = vmatpush.bf16.msra.mxu0 0
    %739 = vmatpush.bf16.msra.mxu0 0
    %740 = vmatpush.bf16.msra.mxu0 0
    %741 = vmatpush.bf16.msra.mxu0 %v426
    %742 = vmatmul.bf16.gmra.mxu0 %v600
    %v743 = vpop.f32.mrf.mxu0
    %v744 = vadd.f32 %v690, %v743
    %v745 = vpop.f32.mrf.mxu0
    %v746 = vadd.f32 %v692, %v745
    %747 = vmatmul.bf16.gmra.mxu0 %v603
    %v748 = vpop.f32.mrf.mxu0
    %v749 = vadd.f32 %v695, %v748
    %v750 = vpop.f32.mrf.mxu0
    %v751 = vadd.f32 %v697, %v750
    %752 = vmatmul.bf16.gmra.mxu0 %v606
    %v753 = vpop.f32.mrf.mxu0
    %v754 = vadd.f32 %v700, %v753
    %v755 = vpop.f32.mrf.mxu0
    %v756 = vadd.f32 %v702, %v755
    %757 = vmatmul.bf16.gmra.mxu0 %v609
    %v758 = vpop.f32.mrf.mxu0
    %v759 = vadd.f32 %v705, %v758
    %v760 = vpop.f32.mrf.mxu0
    %v761 = vadd.f32 %v707, %v760
    %762 = vmatmul.bf16.gmra.mxu0 %v612
    %v763 = vpop.f32.mrf.mxu0
    %v764 = vadd.f32 %v710, %v763
    %v765 = vpop.f32.mrf.mxu0
    %v766 = vadd.f32 %v712, %v765
    %767 = vmatmul.bf16.gmra.mxu0 %v615
    %v768 = vpop.f32.mrf.mxu0
    %v769 = vadd.f32 %v715, %v768
    %v770 = vpop.f32.mrf.mxu0
    %v771 = vadd.f32 %v717, %v770
    %772 = vmatmul.bf16.gmra.mxu0 %v618
    %v773 = vpop.f32.mrf.mxu0
    %v774 = vadd.f32 %v720, %v773
    %v775 = vpop.f32.mrf.mxu0
    %v776 = vadd.f32 %v722, %v775
    %777 = vmatmul.bf16.gmra.mxu0 %v621
    %v778 = vpop.f32.mrf.mxu0
    %v779 = vadd.f32 %v725, %v778
    %v780 = vpop.f32.mrf.mxu0
    %v781 = vadd.f32 %v727, %v780
    %782 = vmatmul.bf16.gmra.mxu0 %v624
    %v783 = vpop.f32.mrf.mxu0
    %v784 = vadd.f32 %v730, %v783
    %v785 = vpop.f32.mrf.mxu0
    %v786 = vadd.f32 %v732, %v785
    %787 = vdwg.mxu0
    %v788 = vpack.c.bf16 %v744, %v744
    %v789 = vpack.c.bf16 %v746, %v746
    %v790 = vpack.c.bf16 %v749, %v749
    %v791 = vpack.c.bf16 %v751, %v751
    %v792 = vpack.c.bf16 %v754, %v754
    %v793 = vpack.c.bf16 %v756, %v756
    %v794 = vpack.c.bf16 %v759, %v759
    %v795 = vpack.c.bf16 %v761, %v761
    %v796 = vpack.c.bf16 %v764, %v764
    %v797 = vpack.c.bf16 %v766, %v766
    %v798 = vpack.c.bf16 %v769, %v769
    %v799 = vpack.c.bf16 %v771, %v771
    %v800 = vpack.c.bf16 %v774, %v774
    %v801 = vpack.c.bf16 %v776, %v776
    %v802 = vpack.c.bf16 %v779, %v779
    %v803 = vpack.c.bf16 %v781, %v781
    %v804 = vpack.c.bf16 %v784, %v784
    %v805 = vpack.c.bf16 %v786, %v786
    %v806 = vunpack.c.l.bf16 %v788
    %v807 = vunpack.c.l.bf16 %v789
    %v808 = vunpack.c.l.bf16 %v790
    %v809 = vunpack.c.l.bf16 %v791
    %v810 = vunpack.c.l.bf16 %v792
    %v811 = vunpack.c.l.bf16 %v793
    %v812 = vunpack.c.l.bf16 %v794
    %v813 = vunpack.c.l.bf16 %v795
    %v814 = vunpack.c.l.bf16 %v796
    %v815 = vunpack.c.l.bf16 %v797
    %v816 = vunpack.c.l.bf16 %v798
    %v817 = vunpack.c.l.bf16 %v799
    %v818 = vunpack.c.l.bf16 %v800
    %v819 = vunpack.c.l.bf16 %v801
    %v820 = vunpack.c.l.bf16 %v802
    %v821 = vunpack.c.l.bf16 %v803
    %v822 = vunpack.c.l.bf16 %v804
    %v823 = vunpack.c.l.bf16 %v805
    %v824 = vmax.f32 %v806, 0.0
    %v825 = vmax.f32 %v807, 0.0
    %v826 = vmax.f32 %v808, 0.0
    %v827 = vmax.f32 %v809, 0.0
    %v828 = vmax.f32 %v810, 0.0
    %v829 = vmax.f32 %v811, 0.0
    %v830 = vmax.f32 %v812, 0.0
    %v831 = vmax.f32 %v813, 0.0
    %v832 = vmax.f32 %v814, 0.0
    %v833 = vmax.f32 %v815, 0.0
    %v834 = vmax.f32 %v816, 0.0
    %v835 = vmax.f32 %v817, 0.0
    %v836 = vmax.f32 %v818, 0.0
    %v837 = vmax.f32 %v819, 0.0
    %v838 = vmax.f32 %v820, 0.0
    %v839 = vmax.f32 %v821, 0.0
    %v840 = vmax.f32 %v822, 0.0
    %v841 = vmax.f32 %v823, 0.0
    %v842 = vpack.c.bf16 %v825, %v824
    %v843 = vpack.c.bf16 %v827, %v826
    %v844 = vpack.c.bf16 %v829, %v828
    %v845 = vpack.c.bf16 %v831, %v830
    %v846 = vpack.c.bf16 %v833, %v832
    %v847 = vpack.c.bf16 %v835, %v834
    %v848 = vpack.c.bf16 %v837, %v836
    %v849 = vpack.c.bf16 %v839, %v838
    %v850 = vpack.c.bf16 %v841, %v840
    %v851 = vld [vmem:[%s3] sm:$0x3]
    %853 = vst [vmem:[#allocation1] ss:$9 sm:$0xff] %v851
    %v854 = vld [vmem:[#allocation1] sm:$0xff]
    %v855 = vld [vmem:[#allocation1 + $0x9] sm:$0xff]
    %v857 = vsel %vm598, %v855, 0
    %859 = vmatpush.bf16.msra.mxu0 %v849
    %860 = vmatpush.bf16.msra.mxu0 %v848
    %861 = vmatpush.bf16.msra.mxu0 %v847
    %862 = vmatpush.bf16.msra.mxu0 %v846
    %863 = vmatpush.bf16.msra.mxu0 %v845
    %864 = vmatpush.bf16.msra.mxu0 %v844
    %865 = vmatpush.bf16.msra.mxu0 %v843
    %866 = vmatpush.bf16.msra.mxu0 %v842
    %867 = vmatmul.bf16.gmra.mxu0 %v854
    %v868 = vpop.f32.mrf.mxu0
    %v869 = vadd.f32 0.0, %v868
    %v870 = vpop.f32.mrf.mxu0
    %871 = vdwg.mxu0
    %872 = vmatpush.bf16.msra.mxu0 0
    %873 = vmatpush.bf16.msra.mxu0 0
    %874 = vmatpush.bf16.msra.mxu0 0
    %875 = vmatpush.bf16.msra.mxu0 0
    %876 = vmatpush.bf16.msra.mxu0 0
    %877 = vmatpush.bf16.msra.mxu0 0
    %878 = vmatpush.bf16.msra.mxu0 0
    %879 = vmatpush.bf16.msra.mxu0 %v850
    %880 = vmatmul.bf16.gmra.mxu0 %v857
    %v881 = vpop.f32.mrf.mxu0
    %v882 = vadd.f32 %v869, %v881
    %v883 = vpop.f32.mrf.mxu0
    %884 = vdwg.mxu0
    %885 = vst [vmem:[#allocation2] sm:$0x1] %v882
    // Predicated region
    $region18: #{vade_cnn_forward.1} parent=1 // pred_check
      _
    $region19: #{vade_cnn_forward.1} parent=1 // pred_check_branch
      %887 = sbr.rel (0) target = $region21
    $region20: #{vade_cnn_forward.1} parent=1 // pred_region
      %889 = vsyncadd [#allocation3], 0
      %s891 = sshll.u32 [#allocation2], 4
      %s892 = int_to_ptr.vmem [resolvable:$true] %s891
      %s893 = sshll.u32 %s4, 4
      %s894 = int_to_ptr.hbm [resolvable:$true] %s893
      %896 = dma.vmem_to_hbm [thread:$0]  %s892, 16, %s894, [#allocation3]
    $region21: #{vade_cnn_forward.1} parent=1 // pred_fallthru
      _
    // Predicated region
    $region22: #{vade_cnn_forward.1} parent=1 // pred_check
      _
    $region23: #{vade_cnn_forward.1} parent=1 // pred_check_branch
      %898 = sbr.rel (0) target = $region25
    $region24: #{vade_cnn_forward.1} parent=1 // pred_region
      %900 = dma.done [#allocation3], 16
    $region25: #{vade_cnn_forward.1} parent=1 // pred_fallthru
      _
    %901 = vsyncpa [#allocation3], 1

</llo_original>
